<compile_context>
chip_gen: v5e
topology: v5e:2x2
jax: 0.10.0
libtpu: 0.0.40
codegen_flags: <defaults>
</compile_context>

<pallas_src>
import math

import jax
import jax.numpy as jnp
from jax import lax
from jax.experimental import pallas as pl
from jax.experimental.pallas import tpu as pltpu

_LANE = 128
_VMEM_BUDGET = 24 * 1024 * 1024    # target working set used for tile selection
_VMEM_LIMIT = 48 * 1024 * 1024     # explicit scoped-VMEM limit (safe v5e..v7x)


def _round_up(n, m):
    return ((n + m - 1) // m) * m


def _vmem_estimate(C, tq, tk):
    """Rough per-step VMEM working set of the main kernel (bytes)."""
    cp = C + 1
    return (2 * C * tq * 4          # query tile, double buffered (f32)
            + 2 * C * tq * 4        # output tile, double buffered (f32)
            + 2 * cp * tk * 2       # augmented bf16 key stream, double buffered
            + 2 * C * C * 4         # channel attention block, double buffered
            + cp * tq * 4           # SSAM numerator + denominator scratch (f32)
            + cp * tq * 2           # cached bf16 query scratch
            + tq * 4                # running row max
            + 2 * tk * tq * 4)      # f / p score temporaries


def _choose_tiles(N, C, tq, tk):
    """Pick (padded N, tq, tk).  Key-stream HBM traffic scales as N/tq, so tq is
    made as large as the VMEM budget allows; tk only sizes the (tk,tq) score
    temporaries.  Padding never falls back to a non-lane-aligned tile."""
    n128 = _round_up(N, _LANE)
    if tq is not None or tk is not None:
        tq = tq if tq is not None else min(n128, 512)
        tk = tk if tk is not None else min(n128, 512)
        assert tq % _LANE == 0 and tk % _LANE == 0, "tiles must be multiples of 128"
        return _round_up(N, math.lcm(tq, tk)), tq, tk
    if n128 <= 512:
        return n128, n128, n128
    tk = 512
    n_pad = _round_up(N, tk)
    tq = tk
    for cand in (2048, 1024):       # prefer the largest tq that divides N_pad
        if n_pad % cand == 0 and _vmem_estimate(C, cand, tk) <= _VMEM_BUDGET:
            tq = cand
            break
    return n_pad, tq, tk


# --------------------------------------------------------------------------
# Pass 1: CSAM channel attention (tiny, C*C*N MACs per batch), hoisted out of
# the main loop.  Grid (batch, key-tile); the (C,C) energy accumulates in a
# persistent scratch and the softmax is emitted on the last key tile.
# --------------------------------------------------------------------------
def _csam_attention_kernel(x_ref, a_ref, ec_ref):
    ki = pl.program_id(1)
    nk = pl.num_programs(1)

    @pl.when(ki == 0)
    def _init():
        ec_ref[...] = jnp.zeros_like(ec_ref)

    x_k = x_ref[0]                                              # (C, TK) f32
    ec_ref[...] += lax.dot_general(x_k, x_k, (((1,), (1,)), ((), ())),
                                   preferred_element_type=jnp.float32)

    @pl.when(ki == nk - 1)
    def _finalize():
        ec = ec_ref[...]
        # softmax(rowmax(E) - E) == exp(rowmin(E) - E) / sum  (shift-invariance)
        e = jnp.exp(jnp.min(ec, axis=-1, keepdims=True) - ec)
        a_ref[0] = e * pl.reciprocal(jnp.sum(e, axis=-1, keepdims=True),
                                     approx=True)


# --------------------------------------------------------------------------
# Pass 2: SSAM online softmax + fused CSAM/residual combine.
# Grid (batch, query-tile, key-tile); key tiles stream in bf16.
# --------------------------------------------------------------------------
def _make_cfpab_kernel(C, tq, tk, n_valid, need_mask):
    def kernel(gamma_ref, ac_ref, xq_ref, xk_ref, o_ref, m_ref, acc_ref, xqb_ref):
        """gamma_ref: SMEM (2,) = [gamma_ca/2, gamma_sa/2].
        ac_ref:  VMEM (1, C, C)   per-batch CSAM channel attention (f32).
        xq_ref:  VMEM (1, C, TQ)  resident f32 query tile.
        xk_ref:  VMEM (1, C+1, TK) bf16 key tile, last row = ones (denominator).
        o_ref:   VMEM (1, C, TQ)  output tile.
        Scratch: m_ref (1,TQ) running max, acc_ref (C+1,TQ) f32 numerator +
        denominator row, xqb_ref (C+1,TQ) cached bf16 query (+ zero row)."""
        ki = pl.program_id(2)
        nk = pl.num_programs(2)

        @pl.when(ki == 0)
        def _init():
            m_ref[...] = jnp.full_like(m_ref, -jnp.inf)
            acc_ref[...] = jnp.zeros_like(acc_ref)
            # Cache the resident query tile once per query tile as bf16; the
            # extra zero row pairs with the ones row appended to the keys.
            xqb_ref[...] = jnp.concatenate(
                [xq_ref[0].astype(jnp.bfloat16),
                 jnp.zeros((1, tq), jnp.bfloat16)], axis=0)

        x_k = xk_ref[0]                 # (C+1, TK) bf16: X rows + ones row
        x_q = xqb_ref[...]              # (C+1, TQ) bf16: X rows + zero row

        # SSAM scores, keys on sublanes / queries on lanes:
        #   f[n, m] = sum_c x[c, ks+n] * x[c, qs+m]   (== energy_s[m, n])
        # The appended ones/zero rows contribute 0 to the contraction.
        f = lax.dot_general(x_k, x_q, (((0,), (0,)), ((), ())),
                            preferred_element_type=jnp.float32)       # (TK, TQ)
        if need_mask:
            pos = ki * tk + lax.broadcasted_iota(jnp.int32, (tk, 1), 0)
            f = jnp.where(pos < n_valid, f, -jnp.inf)

        m_prev = m_ref[...]                                           # (1, TQ)
        m_new = jnp.maximum(m_prev, jnp.max(f, axis=0, keepdims=True))
        alpha = jnp.exp(m_prev - m_new)                               # f32 rescale
        p = jnp.exp((f - m_new).astype(jnp.bfloat16))                 # (TK, TQ) bf16
        # One MXU matmul yields both the SSAM numerator (rows < C) and the
        # softmax denominator (row C, via the ones row of the key tile).
        acc_ref[...] = alpha * acc_ref[...] + jnp.dot(
            x_k, p, preferred_element_type=jnp.float32)
        m_ref[...] = m_new

        @pl.when(ki == nk - 1)
        def _finalize():
            x_q32 = xq_ref[0].astype(jnp.float32)                     # (C, TQ)
            acc = acc_ref[...]
            denom = acc[C:C + 1, :]                                   # (1, TQ)
            sa_raw = acc[:C, :] * pl.reciprocal(denom, approx=True)   # (C, TQ)
            ca_raw = jnp.dot(ac_ref[0], x_q32,
                             preferred_element_type=jnp.float32)      # (C, TQ)
            # Fused combine: (ca + sa)/2 with residual; 1/2 folded into gammas.
            o_ref[0] = (x_q32 + gamma_ref[0] * ca_raw
                        + gamma_ref[1] * sa_raw).astype(o_ref.dtype)

    return kernel


def cfpab_forward(x, gamma_ca, gamma_sa, *, tq=None, tk=None):
    """x: (B, C, H, W) float32.  Returns (B, C, H, W)."""
    B, C, H, W = x.shape
    N = H * W
    n_pad, tq, tk = _choose_tiles(N, C, tq, tk)
    nq, nk = n_pad // tq, n_pad // tk

    x_flat = x.reshape(B, C, N).astype(jnp.float32)
    if n_pad != N:
        # Zero padding is exact for CSAM; padded key columns are masked in-kernel.
        x_flat = jnp.pad(x_flat, ((0, 0), (0, 0), (0, n_pad - N)))

    # ---- pass 1: per-batch CSAM channel attention (hoisted out of hot loop) ----
    attn_c = pl.pallas_call(
        _csam_attention_kernel,
        out_shape=jax.ShapeDtypeStruct((B, C, C), jnp.float32),
        grid_spec=pltpu.PrefetchScalarGridSpec(
            num_scalar_prefetch=0,
            grid=(B, nk),
            in_specs=[pl.BlockSpec((1, C, tk), lambda b, k: (b, 0, k))],
            out_specs=pl.BlockSpec((1, C, C), lambda b, k: (b, 0, 0)),
            scratch_shapes=[pltpu.VMEM((C, C), jnp.float32)]),
        compiler_params=pltpu.CompilerParams(
            dimension_semantics=("parallel", "arbitrary"),
            vmem_limit_bytes=_VMEM_LIMIT),
    )(x_flat)

    # ---- bf16 key stream, with a ones row for the MXU-fused softmax denominator
    xk_aug = jnp.concatenate(
        [x_flat.astype(jnp.bfloat16),
         jnp.ones((B, 1, n_pad), jnp.bfloat16)], axis=1)          # (B, C+1, N_pad)

    # Fold the 1/2 of the final average into the gammas (scalar prefetch -> SMEM).
    gammas = jnp.array([0.5 * gamma_ca, 0.5 * gamma_sa], dtype=jnp.float32)

    kernel = _make_cfpab_kernel(C=C, tq=tq, tk=tk, n_valid=N,
                                need_mask=(n_pad != N))

    out_flat = pl.pallas_call(
        kernel,
        out_shape=jax.ShapeDtypeStruct((B, C, n_pad), x.dtype),
        grid_spec=pltpu.PrefetchScalarGridSpec(
            num_scalar_prefetch=1,                        # gammas land in SMEM
            grid=(B, nq, nk),
            in_specs=[
                pl.BlockSpec((1, C, C), lambda b, qi, ki, g: (b, 0, 0)),       # A_c
                pl.BlockSpec((1, C, tq), lambda b, qi, ki, g: (b, 0, qi)),     # query
                pl.BlockSpec((1, C + 1, tk), lambda b, qi, ki, g: (b, 0, ki)), # keys
            ],
            out_specs=pl.BlockSpec((1, C, tq), lambda b, qi, ki, g: (b, 0, qi)),
            scratch_shapes=[
                pltpu.VMEM((1, tq), jnp.float32),        # running row max
                pltpu.VMEM((C + 1, tq), jnp.float32),    # SSAM numerator + denom
                pltpu.VMEM((C + 1, tq), jnp.bfloat16),   # cached bf16 query tile
            ]),
        compiler_params=pltpu.CompilerParams(
            dimension_semantics=("parallel", "parallel", "arbitrary"),
            vmem_limit_bytes=_VMEM_LIMIT),
    )(gammas, attn_c, x_flat, xk_aug)

    if n_pad != N:
        out_flat = out_flat[:, :, :N]
    return out_flat.reshape(B, C, H, W)


def cfpab_reference(x, gamma_ca, gamma_sa):
    """Pure-JAX f32 reference mirroring the PyTorch forward (for validation)."""
    B, C, H, W = x.shape
    N = H * W
    xf = x.reshape(B, C, N).astype(jnp.float32)

    # CSAM
    energy = jnp.einsum('bcn,bdn->bcd', xf, xf)
    energy_new = jnp.max(energy, axis=-1, keepdims=True) - energy
    attn_c = jax.nn.softmax(energy_new, axis=-1)
    out_ca = gamma_ca * jnp.einsum('bcd,bdn->bcn', attn_c, xf) + xf

    # SSAM
    energy_s = jnp.einsum('bcm,bcn->bmn', xf, xf)
    attn_s = jax.nn.softmax(energy_s, axis=-1)
    out_sa = gamma_sa * jnp.einsum('bcn,bmn->bcm', xf, attn_s) + xf

    return ((out_ca + out_sa) * 0.5).reshape(B, C, H, W)


if __name__ == "__main__":
    # PyTorch default gamma=0 would make the block an identity; use nonzero
    # values to exercise both attention paths.
    GAMMA_CA = 0.5
    GAMMA_SA = 0.3

    key = jax.random.PRNGKey(0)
    k1, k2 = jax.random.split(key)

    # Case 1: divisible spatial extent; tq=tk=128 so the small test shape
    # (N=256) exercises the full tiled path: grid=(2,2,2), multi-step
    # online-softmax accumulation + the hoisted CSAM pass.
    B, C, H, W = 2, 4, 16, 16
    x = jax.random.normal(k1, (B, C, H, W), dtype=jnp.float32)
    out = jax.block_until_ready(cfpab_forward(x, GAMMA_CA, GAMMA_SA, tq=128, tk=128))
    ref = cfpab_reference(x, GAMMA_CA, GAMMA_SA)
    assert out.shape == (B, C, H, W)
    # bf16 MXU inputs / bf16 exp on the SSAM path loosen agreement with the f32
    # reference; structural bugs would show up as O(0.1+) errors.
    err = jnp.max(jnp.abs(out - ref))
    assert jnp.allclose(out, ref, atol=5e-2, rtol=5e-2), f"case1 max abs err {err}"

    # Case 2: non-divisible spatial extent (N=255) exercises the padded +
    # masked key path instead of the old full-width-tile fallback.
    H2, W2 = 15, 17
    x2 = jax.random.normal(k2, (B, C, H2, W2), dtype=jnp.float32)
    out2 = jax.block_until_ready(cfpab_forward(x2, GAMMA_CA, GAMMA_SA, tq=128, tk=128))
    ref2 = cfpab_reference(x2, GAMMA_CA, GAMMA_SA)
    assert out2.shape == (B, C, H2, W2)
    err2 = jnp.max(jnp.abs(out2 - ref2))
    assert jnp.allclose(out2, ref2, atol=5e-2, rtol=5e-2), f"case2 max abs err {err2}"

    print("KERNEL_OK")
</pallas_src>

<mosaic_0001>
module attributes {stable_mosaic.version = 11 : i64} {
  func.func @_csam_attention_kernel(%arg0: i32, %arg1: i32, %arg2: memref<1x4x128xf32, #tpu.memory_space<vmem>>, %arg3: memref<1x4x4xf32, #tpu.memory_space<vmem>>, %arg4: memref<4x4xf32, #tpu.memory_space<vmem>>) attributes {dimension_semantics = [#tpu.dimension_semantics<parallel>, #tpu.dimension_semantics<arbitrary>], iteration_bounds = array<i64: 2, 2>, scalar_prefetch = 0 : i64, scratch_operands = 1 : i64, tpu.core_type = #tpu.core_type<tc>, window_params = [{transform_indices = @transform_0, window_bounds = array<i64: 1, 4, 128>}, {transform_indices = @transform_1, window_bounds = array<i64: 1, 4, 4>}]} {
    %c0_i32 = arith.constant 0 : i32
    %0 = arith.cmpi eq, %arg1, %c0_i32 : i32
    %1 = arith.extui %0 : i1 to i32
    %c0_i32_0 = arith.constant 0 : i32
    %2 = arith.cmpi ne, %1, %c0_i32_0 : i32
    scf.if %2 {
      %cst_8 = arith.constant 0.000000e+00 : f32
      %12 = vector.broadcast %cst_8 : f32 to vector<4x4xf32>
      %c0_9 = arith.constant 0 : index
      %c0_10 = arith.constant 0 : index
      %13 = vector.load %arg4[%c0_9, %c0_10] : memref<4x4xf32, #tpu.memory_space<vmem>>, vector<4x4xf32>
      tpu.vector_store %arg4[%c0_9, %c0_10], %12 {strides = array<i32>} : memref<4x4xf32, #tpu.memory_space<vmem>>, vector<4x4xf32>,
    } else {
    }
    %c0 = arith.constant 0 : index
    %c0_1 = arith.constant 0 : index
    %c0_2 = arith.constant 0 : index
    %3 = vector.load %arg2[%c0, %c0_1, %c0_2] : memref<1x4x128xf32, #tpu.memory_space<vmem>>, vector<1x4x128xf32>
    %4 = vector.shape_cast %3 : vector<1x4x128xf32> to vector<4x128xf32>
    %c0_3 = arith.constant 0 : index
    %c0_4 = arith.constant 0 : index
    %5 = vector.load %arg4[%c0_3, %c0_4] : memref<4x4xf32, #tpu.memory_space<vmem>>, vector<4x4xf32>
    %cst = arith.constant dense<0.000000e+00> : vector<4x4xf32>
    %6 = tpu.matmul %4, %4, %cst {dimension_numbers = #tpu.dot_dimension_numbers<[1], [1], [0], [0], [0, 0, 1, 0], [], []>} : vector<4x128xf32>, vector<4x128xf32>, vector<4x4xf32> -> vector<4x4xf32>
    %7 = arith.addf %5, %6 : vector<4x4xf32>
    %c0_5 = arith.constant 0 : index
    %c0_6 = arith.constant 0 : index
    %8 = vector.load %arg4[%c0_5, %c0_6] : memref<4x4xf32, #tpu.memory_space<vmem>>, vector<4x4xf32>
    tpu.vector_store %arg4[%c0_5, %c0_6], %7 {strides = array<i32>} : memref<4x4xf32, #tpu.memory_space<vmem>>, vector<4x4xf32>,
    %c1_i32 = arith.constant 1 : i32
    %9 = arith.cmpi eq, %arg1, %c1_i32 : i32
    %10 = arith.extui %9 : i1 to i32
    %c0_i32_7 = arith.constant 0 : i32
    %11 = arith.cmpi ne, %10, %c0_i32_7 : i32
    scf.if %11 {
      %c0_8 = arith.constant 0 : index
      %c0_9 = arith.constant 0 : index
      %12 = vector.load %arg4[%c0_8, %c0_9] : memref<4x4xf32, #tpu.memory_space<vmem>>, vector<4x4xf32>
      %cst_10 = arith.constant dense<0x7F800000> : vector<4xf32>
      %13 = vector.multi_reduction <minimumf>, %12, %cst_10 [1] : vector<4x4xf32> to vector<4xf32>
      %14 = vector.shape_cast %13 : vector<4xf32> to vector<4x1xf32>
      %15 = vector.broadcast %14 : vector<4x1xf32> to vector<4x4xf32>
      %16 = arith.subf %15, %12 : vector<4x4xf32>
      %17 = math.exp %16 : vector<4x4xf32>
      %cst_11 = arith.constant dense<0.000000e+00> : vector<4xf32>
      %18 = vector.multi_reduction <add>, %17, %cst_11 [1] : vector<4x4xf32> to vector<4xf32>
      %19 = vector.shape_cast %18 : vector<4xf32> to vector<4x1xf32>
      %20 = tpu.reciprocal %19 {approx = true} : vector<4x1xf32> -> vector<4x1xf32>
      %21 = vector.broadcast %20 : vector<4x1xf32> to vector<4x4xf32>
      %22 = arith.mulf %17, %21 : vector<4x4xf32>
      %c0_12 = arith.constant 0 : index
      %c0_13 = arith.constant 0 : index
      %c0_14 = arith.constant 0 : index
      %23 = vector.load %arg3[%c0_12, %c0_13, %c0_14] : memref<1x4x4xf32, #tpu.memory_space<vmem>>, vector<1x4x4xf32>
      %24 = vector.shape_cast %23 : vector<1x4x4xf32> to vector<4x4xf32>
      %25 = vector.shape_cast %22 : vector<4x4xf32> to vector<1x4x4xf32>
      tpu.vector_store %arg3[%c0_12, %c0_13, %c0_14], %25 {strides = array<i32>} : memref<1x4x4xf32, #tpu.memory_space<vmem>>, vector<1x4x4xf32>,
    } else {
    }
    return
  }
  func.func @transform_0(%arg0: i32, %arg1: i32) -> (i32, i32, i32) {
    %c0_i32 = arith.constant 0 : i32
    %c0_i32_0 = arith.constant 0 : i32
    return %arg0, %c0_i32, %arg1 : i32, i32, i32
  }
  func.func @transform_1(%arg0: i32, %arg1: i32) -> (i32, i32, i32) {
    %c0_i32 = arith.constant 0 : i32
    %c0_i32_0 = arith.constant 0 : i32
    %c0_i32_1 = arith.constant 0 : i32
    return %arg0, %c0_i32, %c0_i32_0 : i32, i32, i32
  }
}

</mosaic_0001>

<llo_original>
// kernel: tpu_custom_call.1
$region0: #{tpu_custom_call.1}
  #allocation0 [shape = 'u32[]', space=smem, size = 0x4, offset = 0x4, fixed_abs, tag = 'smem constant byte address 0x4 - core index']
  #allocation1 [shape = 'u32[72,128]{1,0:T(1,128)}', space=vmem, size = 0x9000, scoped, tag = 'internal scratch']
  #allocation2 [shape = 'f32[4,4]{1,0:T(4,128)}', space=vmem, size = 0x800, scoped, tag = 'scratch operand']
  %s0 = inlined_call_operand.hbm [shape: f32[2,4,256], index: 0, kind: input, shape index: {}]
  %s1 = inlined_call_operand.hbm [shape: f32[2,4,4], index: 1, kind: output, shape index: {}]
  %s2 = sld [smem:[#allocation0]]
  $region49: #{tpu_custom_call.1} parent=0
    _
  %s4 = ssub.s32 1, %s2
  %s5 = scalar_select 0, %s4, %s2
  $region1: #{tpu_custom_call.1} parent=0
    #allocation3 [shape = 'u8[4096]{0}', space=vmem, size = 0x1000, scoped, tag = 'input window, operand 0']
    #allocation4 [shape = 's32[2]{0}', space=sflag, size = 0x8, scoped, tag = 'scoped memory for tpu_custom_call.1']
    #allocation5 [shape = 's32[2]{0}', space=sflag, size = 0x8, scoped, tag = 'scoped memory for tpu_custom_call.1']
    #allocation6 [shape = 'u8[4096]{0}', space=vmem, size = 0x1000, scoped, tag = 'output window, operand 0']
    %6 = vsyncpa [#allocation4], 0
    %s7 = scalar_lea.sflag [#allocation4], 1
    %8 = vsyncpa %s7, 0
    %9 = vsyncpa [#allocation5], 0
    %s10 = scalar_lea.sflag [#allocation5], 1
    %11 = vsyncpa %s10, 0
    loop: start=0, step=1, limit=6
    $region2: #{tpu_custom_call.1} parent=1 // loop_pre_header
      _
    $region3: #{tpu_custom_call.1} parent=1 // loop_header
      %s13 = sphi 0, %s17
      %p14 = scmp.ge.s32.totalorder %s13, 6
      %s20 = sphi 0, %s32
      %s21 = sphi 0, %s28
      %s22 = sphi 0, %s20
      %s23 = sphi 0, %s21
      %s24 = sphi 0, %s22
      %s25 = sphi 0, %s23
      %s37 = sphi 0, %s39
      %s40 = sphi 0, %s37
      %s41 = sphi 0, %s40
      %s57 = sphi 0, %s41
      %s63 = sphi 0, %s65
      %s66 = sphi 0, %s63
      %s67 = sphi 0, %s66
      %s83 = sphi 0, %s67
    $region4: #{tpu_custom_call.1} parent=1 // loop_header_branch
      %16 = sbr.rel (%p14) target = $region8
    $region5: #{tpu_custom_call.1} parent=1 // loop_body
      %s18 = ssub.s32 %s13, 1
      %s19 = ssub.s32 %s13, 2
      %s26 = sadd.s32 1, %s21
      %p27 = scmp.ge.s32.totalorder %s26, 2
      %s28 = scalar_select %p27, 0, %s26
      %s29 = sadd.s32 1, %s20
      %s30 = scalar_select %p27, %s29, %s20
      %p31 = scmp.ge.s32.totalorder %s30, 2
      %s32 = scalar_select %p31, 0, %s30
      %s33 = ssub.s32 %s20, %s32
      %s34 = ssub.s32 %s21, %s28
      %s35 = sor.u32 %s33, %s34
      %p36 = scmp.eq.s32.totalorder %s35, 0
      %s38 = sadd.s32 %s37, 1
      %s39 = scalar_select %p36, %s37, %s38
      %p42 = pneg %p36
      %p43 = scmp.eq.s32.totalorder %s13, 3
      %p44 = por %p42, %p43
      %p45 = scmp.ne.s32.totalorder %s37, %s40
      %p46 = scmp.eq.s32.totalorder %s13, 0
      %p47 = por %p45, %p46
      %p48 = scmp.ne.s32.totalorder %s37, %s40
      %p49 = scmp.eq.s32.totalorder %s18, 3
      %p50 = por %p48, %p49
      %p51 = scmp.ne.s32.totalorder %s40, %s41
      %p52 = scmp.eq.s32.totalorder %s18, 0
      %p53 = por %p51, %p52
      %p54 = scmp.ne.s32.totalorder %s40, %s41
      %p55 = scmp.eq.s32.totalorder %s19, 3
      %p56 = por %p54, %p55
      %p58 = scmp.ne.s32.totalorder %s41, %s57
      %p59 = scmp.eq.s32.totalorder %s19, 0
      %p60 = por %p58, %p59
      %s61 = ssub.s32 %s20, %s32
      %p62 = scmp.eq.s32.totalorder %s61, 0
      %s64 = sadd.s32 %s63, 1
      %s65 = scalar_select %p62, %s63, %s64
      %p68 = pneg %p62
      %p69 = scmp.eq.s32.totalorder %s13, 3
      %p70 = por %p68, %p69
      %p71 = scmp.ne.s32.totalorder %s63, %s66
      %p72 = scmp.eq.s32.totalorder %s13, 0
      %p73 = por %p71, %p72
      %p74 = scmp.ne.s32.totalorder %s63, %s66
      %p75 = scmp.eq.s32.totalorder %s18, 3
      %p76 = por %p74, %p75
      %p77 = scmp.ne.s32.totalorder %s66, %s67
      %p78 = scmp.eq.s32.totalorder %s18, 0
      %p79 = por %p77, %p78
      %p80 = scmp.ne.s32.totalorder %s66, %s67
      %p81 = scmp.eq.s32.totalorder %s19, 3
      %p82 = por %p80, %p81
      %p84 = scmp.ne.s32.totalorder %s67, %s83
      %p85 = scmp.eq.s32.totalorder %s19, 0
      %p86 = por %p84, %p85
      %p87 = scmp.le.s32.totalorder 1, %s13
      %p88 = scmp.lt.s32.totalorder %s13, 5
      %p89 = pnand %p87, %p88
      %p90 = pneg %p89
      // Predicated region
      $region9: #{tpu_custom_call.1} parent=5 // pred_check
        _
      $region10: #{tpu_custom_call.1} parent=5 // pred_check_branch
        %92 = sbr.rel (%p89) target = $region12
      $region11: #{tpu_custom_call.1} parent=5 // pred_region
        %s93 = ssub.s32 %s13, 1
      $region12: #{tpu_custom_call.1} parent=5 // pred_fallthru
        _
      %p94 = scmp.lt.s32.totalorder %s13, 4
      // Predicated region
      $region13: #{tpu_custom_call.1} parent=5 // pred_check
        %p95 = pneg %p94
      $region14: #{tpu_custom_call.1} parent=5 // pred_check_branch
        %97 = sbr.rel (%p95) target = $region16
      $region15: #{tpu_custom_call.1} parent=5 // pred_region
        // Predicated region
        $region17: #{tpu_custom_call.1} parent=15 // pred_check
          %p98 = pneg %p47
        $region18: #{tpu_custom_call.1} parent=15 // pred_check_branch
          %100 = sbr.rel (%p98) target = $region20
        $region19: #{tpu_custom_call.1} parent=15 // pred_region
          %s101 = sand.u32 %s37, 1
          %s102 = scalar_lea.sflag [#allocation4], %s101
          %s103 = sand.u32 %s37, 1
          %s104 = smul.addr %s103, 4
          %s105 = scalar_lea.vmem [#allocation3], %s104
          %107 = vsyncadd %s102, 0
          %s108 = smul.addr %s20, 2
          %s109 = sadd.s32 %s21, %s108
          %s110 = smul.addr %s109, 4
          %s111 = scalar_lea.hbm %s0, %s110
          %s113 = sshll.u32 %s111, 4
          %s114 = int_to_ptr.hbm [resolvable:$true] %s113
          %s115 = sshll.u32 %s105, 4
          %s116 = int_to_ptr.vmem [resolvable:$true] %s115
          %118 = dma.hbm_to_vmem [thread:$0]  %s114, 64, %s116, %s102
        $region20: #{tpu_custom_call.1} parent=15 // pred_fallthru
          _
      $region16: #{tpu_custom_call.1} parent=5 // pred_fallthru
        _
      %p119 = scmp.le.s32.totalorder 1, %s13
      %p120 = scmp.lt.s32.totalorder %s13, 5
      %p121 = pnand %p119, %p120
      %p122 = pneg %p121
      // Predicated region
      $region21: #{tpu_custom_call.1} parent=5 // pred_check
        _
      $region22: #{tpu_custom_call.1} parent=5 // pred_check_branch
        %124 = sbr.rel (%p121) target = $region24
      $region23: #{tpu_custom_call.1} parent=5 // pred_region
        %s125 = ssub.s32 %s13, 1
        %s126 = sand.u32 %s40, 1
        %s127 = scalar_lea.sflag [#allocation4], %s126
        %s128 = sand.u32 %s40, 1
        %s129 = smul.addr %s128, 4
        %s130 = scalar_lea.vmem [#allocation3], %s129
        // Predicated region
        $region25: #{tpu_custom_call.1} parent=23 // pred_check
          %p131 = pneg %p53
        $region26: #{tpu_custom_call.1} parent=23 // pred_check_branch
          %133 = sbr.rel (%p131) target = $region28
        $region27: #{tpu_custom_call.1} parent=23 // pred_region
          %135 = dma.done %s127, 64
        $region28: #{tpu_custom_call.1} parent=23 // pred_fallthru
          _
        %s136 = sand.u32 %s40, 1
        %s137 = scalar_lea.sflag [#allocation4], %s136
        %s138 = sand.u32 %s40, 1
        %s139 = smul.addr %s138, 4
        %s140 = scalar_lea.vmem [#allocation3], %s139
        %p141 = pneg %p53
        %p142 = pneg %p50
        %p143 = pneg %p79
        %p144 = pneg %p76
        %s145 = sand.u32 %s66, 1
        %s146 = scalar_lea.sflag [#allocation5], %s145
        %s147 = sand.u32 %s66, 1
        %s148 = smul.addr %s147, 4
        %s149 = scalar_lea.vmem [#allocation6], %s148
        %p150 = scmp.eq.s32.totalorder %s23, 0
        // Predicated region
        $region29: #{tpu_custom_call.1} parent=23 // pred_check
          %p151 = pneg %p150
        $region30: #{tpu_custom_call.1} parent=23 // pred_check_branch
          %153 = sbr.rel (%p151) target = $region32
        $region31: #{tpu_custom_call.1} parent=23 // pred_region
          %vm154 = vcmask 27648
          %155 = vst.msk [vmem:[#allocation2] sm:$0xf] %vm154, 0.0
        $region32: #{tpu_custom_call.1} parent=23 // pred_fallthru
          _
        %v156 = vld [vmem:[%s130] sm:$0xf]
        %v157 = vld [vmem:[#allocation2] sm:$0xf]
        %158 = vmatpush.xpose.msra.mxu0 0.0
        %159 = vmatpush.xpose.msra.mxu0 0.0
        %160 = vmatpush.xpose.msra.mxu0 0.0
        %161 = vmatpush.xpose.msra.mxu0 0.0
        %162 = vmatpush.xpose.msra.mxu0 0.0
        %163 = vmatpush.xpose.msra.mxu0 0.0
        %164 = vmatpush.xpose.msra.mxu0 0.0
        %165 = vmatpush.xpose.msra.mxu0 0.0
        %166 = vmatpush.xpose.msra.mxu0 0.0
        %167 = vmatpush.xpose.msra.mxu0 0.0
        %168 = vmatpush.xpose.msra.mxu0 0.0
        %169 = vmatpush.xpose.msra.mxu0 0.0
        %170 = vmatpush.xpose.msra.mxu0 0.0
        %171 = vmatpush.xpose.msra.mxu0 0.0
        %172 = vmatpush.xpose.msra.mxu0 0.0
        %173 = vmatpush.xpose.msra.mxu0 %v156
        %174 = vmatmul.f32.gmra.mxu0 %v156
        %v175 = vpop.f32.mrf.mxu0
        %v176 = vadd.f32 0.0, %v175
        %177 = vdwg.mxu0
        %v178 = vadd.f32 %v157, %v176
        %vm179 = vcmask 27648
        %180 = vst.msk [vmem:[#allocation2] sm:$0xf] %vm179, %v178
        %p181 = scmp.eq.s32.totalorder %s23, 1
        // Predicated region
        $region33: #{tpu_custom_call.1} parent=23 // pred_check
          %p182 = pneg %p181
        $region34: #{tpu_custom_call.1} parent=23 // pred_check_branch
          %184 = sbr.rel (%p182) target = $region36
        $region35: #{tpu_custom_call.1} parent=23 // pred_region
          %v185 = vld [vmem:[#allocation2] sm:$0xf]
          %v186 = vsel %vm179, %v185, inf
          %187 = vmin.xlane.f32.xlu0 %v186
          %v188 = vpop.xlane.xlu0 %187
          %v189 = vsub.f32 %v188, %v185
          %v190 = vmul.f32 %v189, 1.442695
          %v191 = vpow.pop %v190
          %v192 = vsel %vm179, %v191, 0.0
          %193 = vadd.xlane.f32.xlu0 %v192
          %v194 = vpop.xlane.xlu0 %193
          %v195 = vrcp.pop %v194
          %v196 = vmul.f32 %v191, %v195
          %197 = vst.msk [vmem:[%s149] sm:$0xf] %vm179, %v196
        $region36: #{tpu_custom_call.1} parent=23 // pred_fallthru
          _
        %s198 = sand.u32 %s66, 1
        %s199 = scalar_lea.sflag [#allocation5], %s198
        %s200 = sand.u32 %s66, 1
        %s201 = smul.addr %s200, 4
        %s202 = scalar_lea.vmem [#allocation6], %s201
        // Predicated region
        $region37: #{tpu_custom_call.1} parent=23 // pred_check
          %p203 = pneg %p76
        $region38: #{tpu_custom_call.1} parent=23 // pred_check_branch
          %205 = sbr.rel (%p203) target = $region40
        $region39: #{tpu_custom_call.1} parent=23 // pred_region
          %207 = vsyncadd %s199, 0
          %s208 = smul.addr %s22, 4
          %s209 = scalar_lea.hbm %s1, %s208
          %s211 = sshll.u32 %s202, 4
          %s212 = int_to_ptr.vmem [resolvable:$true] %s211
          %s213 = sshll.u32 %s209, 4
          %s214 = int_to_ptr.hbm [resolvable:$true] %s213
          %216 = dma.vmem_to_hbm [thread:$0]  %s212, 64, %s214, %s199
        $region40: #{tpu_custom_call.1} parent=23 // pred_fallthru
          _
      $region24: #{tpu_custom_call.1} parent=5 // pred_fallthru
        _
      %p217 = scmp.le.s32.totalorder 2, %s13
      // Predicated region
      $region41: #{tpu_custom_call.1} parent=5 // pred_check
        %p218 = pneg %p217
      $region42: #{tpu_custom_call.1} parent=5 // pred_check_branch
        %220 = sbr.rel (%p218) target = $region44
      $region43: #{tpu_custom_call.1} parent=5 // pred_region
        %s221 = ssub.s32 %s13, 2
        // Predicated region
        $region45: #{tpu_custom_call.1} parent=43 // pred_check
          %p222 = pneg %p82
        $region46: #{tpu_custom_call.1} parent=43 // pred_check_branch
          %224 = sbr.rel (%p222) target = $region48
        $region47: #{tpu_custom_call.1} parent=43 // pred_region
          %s225 = sand.u32 %s67, 1
          %s226 = scalar_lea.sflag [#allocation5], %s225
          %s227 = sand.u32 %s67, 1
          %s228 = smul.addr %s227, 4
          %s229 = scalar_lea.vmem [#allocation6], %s228
          %231 = dma.done %s226, 64
        $region48: #{tpu_custom_call.1} parent=43 // pred_fallthru
          _
      $region44: #{tpu_custom_call.1} parent=5 // pred_fallthru
        _
    $region6: #{tpu_custom_call.1} parent=1 // loop_footer
      %s17 = sadd.s32 1, %s13
    $region7: #{tpu_custom_call.1} parent=1 // loop_footer_branch
      %12 = sbr.rel target = $region3
    $region8: #{tpu_custom_call.1} parent=1 // loop_exit
      _
    %232 = vsyncpa [#allocation4], 1
    %s233 = scalar_lea.sflag [#allocation4], 1
    %234 = vsyncpa %s233, 1
    %235 = vsyncpa [#allocation5], 1
    %s236 = scalar_lea.sflag [#allocation5], 1
    %237 = vsyncpa %s236, 1

</llo_original>
